<compile_context>
chip_gen: v5e
topology: v5e:2x2
jax: 0.10.0
libtpu: 0.0.40
codegen_flags: <defaults>
</compile_context>

<pallas_src>
import math

import jax
import jax.numpy as jnp
from jax.experimental import pallas as pl
from jax.experimental.pallas import tpu as pltpu


# ---------------------------------------------------------------------------
# Fused kernel: x block [S0, tq]  ->  chain of L Linears along the sublane axis
# kernel(x_ref, w0_ref, b0_ref, ..., w{L-1}_ref, b{L-1}_ref, o_ref)
# ---------------------------------------------------------------------------
def _make_fused_mlp_kernel(num_layers, precision):
    def kernel(*refs):
        x_ref = refs[0]
        o_ref = refs[-1]
        h = x_ref[...]                        # [S0, tq]  (batch dim squeezed)
        for i in range(num_layers):
            w = refs[1 + 2 * i][...]          # [out_i, in_i]  (nn.Linear layout)
            b = refs[2 + 2 * i][...]          # [out_i, 1]
            # h_new[n, d] = sum_s w[n, s] * h[s, d] + b[n]   (D stays on lanes)
            h = jax.lax.dot_general(
                w, h,
                dimension_numbers=(((1,), (0,)), ((), ())),
                precision=precision,
                preferred_element_type=jnp.float32,
            ) + b.astype(jnp.float32)
            # NOTE: the original module's inter-layer `fc = self.activate(x)` is
            # dead code (never assigned back) -> intentionally no activation.
        o_ref[...] = h.astype(o_ref.dtype)

    return kernel


# ---------------------------------------------------------------------------
# Fused forward: whole MLP in one pallas_call.
#   weights[i]: [out_features[i], in_features[i]]  (nn.Linear layout, NOT transposed)
#   biases[i]:  [out_features[i]]
#   dims: int (or list with one shared value) -- axis the Linears act along.
# ---------------------------------------------------------------------------
def mlp_forward(x, weights, biases, dims, *, tq_max=512,
                precision=jax.lax.Precision.HIGHEST):
    if not isinstance(dims, int):
        # The upstream module only ever populates self.dims from an int; a true
        # per-layer-different-axis chain would need per-layer calls.
        assert all(d == dims[0] for d in dims), "fused kernel needs a shared axis"
        dims = dims[0]
    d = dims % x.ndim
    S0 = x.shape[d]
    assert weights[0].shape[1] == S0, (weights[0].shape, S0)
    for i in range(len(weights) - 1):
        assert weights[i + 1].shape[1] == weights[i].shape[0], "layer chain mismatch"
    assert tq_max % 128 == 0

    # View x as [pre, S0, post]: contiguous collapse -> free reshape, no transpose.
    pre = math.prod(x.shape[:d])
    post = math.prod(x.shape[d + 1:])
    x3 = x.reshape(pre, S0, post)

    n_last = weights[-1].shape[0]
    # Lane tile: full extent if it fits, else a 128-aligned tile with a cdiv grid
    # (edge tiles are masked by Pallas -> no oversized full-extent fallback).
    tq = post if post <= tq_max else tq_max
    grid = (pre, pl.cdiv(post, tq))

    in_specs = [pl.BlockSpec((None, S0, tq), lambda p, q: (p, 0, q))]
    operands = [x3]
    for w, b in zip(weights, biases):
        n_out, n_in = w.shape
        in_specs.append(pl.BlockSpec((n_out, n_in), lambda p, q: (0, 0)))  # resident
        in_specs.append(pl.BlockSpec((n_out, 1), lambda p, q: (0, 0)))     # resident
        operands += [w, b.reshape(n_out, 1)]

    out3 = pl.pallas_call(
        _make_fused_mlp_kernel(len(weights), precision),
        out_shape=jax.ShapeDtypeStruct((pre, n_last, post), x.dtype),
        grid_spec=pltpu.PrefetchScalarGridSpec(
            num_scalar_prefetch=0,
            grid=grid,
            in_specs=in_specs,
            out_specs=pl.BlockSpec((None, n_last, tq), lambda p, q: (p, 0, q)),
        ),
        compiler_params=pltpu.CompilerParams(
            dimension_semantics=("parallel", "parallel"),
            # Generous but safe on every generation (v5e/v6e: 128 MiB physical,
            # v7x: 64 MiB physical -> keep headroom under ~48 MiB).
            vmem_limit_bytes=48 * 1024 * 1024,
        ),
    )(*operands)

    return out3.reshape(x.shape[:d] + (n_last,) + x.shape[d + 1:])


# ---------------------------------------------------------------------------
# Pure-JAX reference (mirrors the PyTorch forward literally)
# ---------------------------------------------------------------------------
def mlp_ref(x, weights, biases, dims_list):
    for i, (w, b) in enumerate(zip(weights, biases)):
        x = jnp.swapaxes(x, dims_list[i], -1)
        x = jnp.einsum("...k,nk->...n", x, w,
                       precision=jax.lax.Precision.HIGHEST) + b
        x = jnp.swapaxes(x, dims_list[i], -1)
        # inter-layer activation is dead code in the original -> nothing here
    return x


# ---------------------------------------------------------------------------
# Main
# ---------------------------------------------------------------------------
if __name__ == "__main__":
    # MLP(in_features=[8, 16], out_features=[16, 8], dims=1, activation='relu')
    in_features = [8, 16]
    out_features = [16, 8]
    dims = 1                      # each Linear acts along axis 1
    B, S, D = 2, 8, 128           # x: [batch, axis-1 (= in_features[0]), feature]

    key = jax.random.PRNGKey(0)
    keys = jax.random.split(key, 1 + 2 * len(in_features))
    x = jax.random.normal(keys[0], (B, S, D), dtype=jnp.float32)

    weights, biases = [], []
    for i, (fi, fo) in enumerate(zip(in_features, out_features)):
        bound = 1.0 / math.sqrt(fi)      # nn.Linear default init range
        w = jax.random.uniform(keys[1 + 2 * i], (fo, fi), jnp.float32, -bound, bound)
        b = jax.random.uniform(keys[2 + 2 * i], (fo,), jnp.float32, -bound, bound)
        weights.append(w)
        biases.append(b)

    out = mlp_forward(x, weights, biases, dims)
    out = jax.block_until_ready(out)

    ref = mlp_ref(x, weights, biases, [dims] * len(weights))
    assert out.shape == ref.shape == (B, S, D), (out.shape, ref.shape)
    assert jnp.allclose(out, ref, atol=1e-4, rtol=1e-4), "MLP forward mismatch"

    print("KERNEL_OK")
</pallas_src>

<mosaic_0001>
module attributes {stable_mosaic.version = 11 : i64} {
  func.func @kernel(%arg0: i32, %arg1: i32, %arg2: memref<1x8x128xf32, #tpu.memory_space<vmem>>, %arg3: memref<16x8xf32, #tpu.memory_space<vmem>>, %arg4: memref<16x1xf32, #tpu.memory_space<vmem>>, %arg5: memref<8x16xf32, #tpu.memory_space<vmem>>, %arg6: memref<8x1xf32, #tpu.memory_space<vmem>>, %arg7: memref<1x8x128xf32, #tpu.memory_space<vmem>>) attributes {dimension_semantics = [#tpu.dimension_semantics<parallel>, #tpu.dimension_semantics<parallel>], iteration_bounds = array<i64: 2, 1>, scalar_prefetch = 0 : i64, scratch_operands = 0 : i64, tpu.core_type = #tpu.core_type<tc>, window_params = [{transform_indices = @transform_0, window_bounds = array<i64: 1, 8, 128>}, {pipeline_mode = #tpu.pipeline_mode<synchronous>, transform_indices = @transform_1, window_bounds = array<i64: 16, 8>}, {pipeline_mode = #tpu.pipeline_mode<synchronous>, transform_indices = @transform_2, window_bounds = array<i64: 16, 1>}, {pipeline_mode = #tpu.pipeline_mode<synchronous>, transform_indices = @transform_3, window_bounds = array<i64: 8, 16>}, {pipeline_mode = #tpu.pipeline_mode<synchronous>, transform_indices = @transform_4, window_bounds = array<i64: 8, 1>}, {transform_indices = @transform_5, window_bounds = array<i64: 1, 8, 128>}]} {
    %c0 = arith.constant 0 : index
    %c0_0 = arith.constant 0 : index
    %c0_1 = arith.constant 0 : index
    %0 = vector.load %arg2[%c0, %c0_0, %c0_1] : memref<1x8x128xf32, #tpu.memory_space<vmem>>, vector<1x8x128xf32>
    %1 = vector.shape_cast %0 : vector<1x8x128xf32> to vector<8x128xf32>
    %c0_2 = arith.constant 0 : index
    %c0_3 = arith.constant 0 : index
    %2 = vector.load %arg3[%c0_2, %c0_3] : memref<16x8xf32, #tpu.memory_space<vmem>>, vector<16x8xf32>
    %c0_4 = arith.constant 0 : index
    %c0_5 = arith.constant 0 : index
    %3 = vector.load %arg4[%c0_4, %c0_5] : memref<16x1xf32, #tpu.memory_space<vmem>>, vector<16x1xf32>
    %cst = arith.constant dense<0.000000e+00> : vector<16x128xf32>
    %4 = tpu.matmul %2, %1, %cst {dimension_numbers = #tpu.dot_dimension_numbers<[1], [0], [0], [1], [0, 0, 1, 1], [], []>, precision = #tpu.contract_precision<fp32>} : vector<16x8xf32>, vector<8x128xf32>, vector<16x128xf32> -> vector<16x128xf32>
    %5 = vector.broadcast %3 : vector<16x1xf32> to vector<16x128xf32>
    %6 = arith.addf %4, %5 : vector<16x128xf32>
    %c0_6 = arith.constant 0 : index
    %c0_7 = arith.constant 0 : index
    %7 = vector.load %arg5[%c0_6, %c0_7] : memref<8x16xf32, #tpu.memory_space<vmem>>, vector<8x16xf32>
    %c0_8 = arith.constant 0 : index
    %c0_9 = arith.constant 0 : index
    %8 = vector.load %arg6[%c0_8, %c0_9] : memref<8x1xf32, #tpu.memory_space<vmem>>, vector<8x1xf32>
    %cst_10 = arith.constant dense<0.000000e+00> : vector<8x128xf32>
    %9 = tpu.matmul %7, %6, %cst_10 {dimension_numbers = #tpu.dot_dimension_numbers<[1], [0], [0], [1], [0, 0, 1, 1], [], []>, precision = #tpu.contract_precision<fp32>} : vector<8x16xf32>, vector<16x128xf32>, vector<8x128xf32> -> vector<8x128xf32>
    %10 = vector.broadcast %8 : vector<8x1xf32> to vector<8x128xf32>
    %11 = arith.addf %9, %10 : vector<8x128xf32>
    %c0_11 = arith.constant 0 : index
    %c0_12 = arith.constant 0 : index
    %c0_13 = arith.constant 0 : index
    %12 = vector.load %arg7[%c0_11, %c0_12, %c0_13] : memref<1x8x128xf32, #tpu.memory_space<vmem>>, vector<1x8x128xf32>
    %13 = vector.shape_cast %12 : vector<1x8x128xf32> to vector<8x128xf32>
    %14 = vector.shape_cast %11 : vector<8x128xf32> to vector<1x8x128xf32>
    tpu.vector_store %arg7[%c0_11, %c0_12, %c0_13], %14 {strides = array<i32>} : memref<1x8x128xf32, #tpu.memory_space<vmem>>, vector<1x8x128xf32>,
    return
  }
  func.func @transform_0(%arg0: i32, %arg1: i32) -> (i32, i32, i32) {
    %c0_i32 = arith.constant 0 : i32
    %c0_i32_0 = arith.constant 0 : i32
    return %arg0, %c0_i32, %arg1 : i32, i32, i32
  }
  func.func @transform_1(%arg0: i32, %arg1: i32) -> (i32, i32) {
    %c0_i32 = arith.constant 0 : i32
    %c0_i32_0 = arith.constant 0 : i32
    %c0_i32_1 = arith.constant 0 : i32
    return %c0_i32, %c0_i32_0 : i32, i32
  }
  func.func @transform_2(%arg0: i32, %arg1: i32) -> (i32, i32) {
    %c0_i32 = arith.constant 0 : i32
    %c0_i32_0 = arith.constant 0 : i32
    %c0_i32_1 = arith.constant 0 : i32
    return %c0_i32, %c0_i32_0 : i32, i32
  }
  func.func @transform_3(%arg0: i32, %arg1: i32) -> (i32, i32) {
    %c0_i32 = arith.constant 0 : i32
    %c0_i32_0 = arith.constant 0 : i32
    %c0_i32_1 = arith.constant 0 : i32
    return %c0_i32, %c0_i32_0 : i32, i32
  }
  func.func @transform_4(%arg0: i32, %arg1: i32) -> (i32, i32) {
    %c0_i32 = arith.constant 0 : i32
    %c0_i32_0 = arith.constant 0 : i32
    %c0_i32_1 = arith.constant 0 : i32
    return %c0_i32, %c0_i32_0 : i32, i32
  }
  func.func @transform_5(%arg0: i32, %arg1: i32) -> (i32, i32, i32) {
    %c0_i32 = arith.constant 0 : i32
    %c0_i32_0 = arith.constant 0 : i32
    return %arg0, %c0_i32, %arg1 : i32, i32, i32
  }
}

</mosaic_0001>

<llo_original>
// kernel: tpu_custom_call.1
$region0: #{tpu_custom_call.1}
  #allocation0 [shape = 'u32[]', space=smem, size = 0x4, offset = 0x4, fixed_abs, tag = 'smem constant byte address 0x4 - core index']
  #allocation1 [shape = 'u32[72,128]{1,0:T(1,128)}', space=vmem, size = 0x9000, scoped, tag = 'internal scratch']
  %s0 = inlined_call_operand.vmem [shape: f32[2,8,128], index: 0, kind: input, shape index: {}]
  %s1 = inlined_call_operand.vmem [shape: f32[16,8], index: 1, kind: input, shape index: {}]
  %s2 = inlined_call_operand.vmem [shape: f32[16,1], index: 2, kind: input, shape index: {}]
  %s3 = inlined_call_operand.vmem [shape: f32[8,16], index: 3, kind: input, shape index: {}]
  %s4 = inlined_call_operand.vmem [shape: f32[8,1], index: 4, kind: input, shape index: {}]
  %s5 = inlined_call_operand.hbm [shape: f32[2,8,128], index: 5, kind: output, shape index: {}]
  %s6 = sld [smem:[#allocation0]]
  $region53: #{tpu_custom_call.1} parent=0
    _
  %s8 = ssub.s32 1, %s6
  %s9 = scalar_select 0, %s8, %s6
  $region1: #{tpu_custom_call.1} parent=0
    #allocation2 [shape = 'u8[8192]{0}', space=vmem, size = 0x2000, scoped, tag = 'output window, operand 0']
    #allocation3 [shape = 's32[2]{0}', space=sflag, size = 0x8, scoped, tag = 'scoped memory for tpu_custom_call.1']
    %10 = vsyncpa [#allocation3], 0
    %s11 = scalar_lea.sflag [#allocation3], 1
    %12 = vsyncpa %s11, 0
    loop: start=0, step=1, limit=4
    $region2: #{tpu_custom_call.1} parent=1 // loop_pre_header
      _
    $region3: #{tpu_custom_call.1} parent=1 // loop_header
      %s14 = sphi 0, %s18
      %p15 = scmp.ge.s32.totalorder %s14, 4
      %s21 = sphi 0, %s33
      %s22 = sphi 0, %s29
      %s23 = sphi 0, %s21
      %s24 = sphi 0, %s22
      %s25 = sphi 0, %s23
      %s26 = sphi 0, %s24
      %s38 = sphi 0, %s40
      %s41 = sphi 0, %s38
      %s42 = sphi 0, %s41
      %s58 = sphi 0, %s42
      %s62 = sphi 0, %s62
      %s64 = sphi 0, %s62
      %s65 = sphi 0, %s64
      %s79 = sphi 0, %s65
      %s83 = sphi 0, %s83
      %s85 = sphi 0, %s83
      %s86 = sphi 0, %s85
      %s100 = sphi 0, %s86
      %s104 = sphi 0, %s104
      %s106 = sphi 0, %s104
      %s107 = sphi 0, %s106
      %s121 = sphi 0, %s107
      %s125 = sphi 0, %s125
      %s127 = sphi 0, %s125
      %s128 = sphi 0, %s127
      %s142 = sphi 0, %s128
      %s150 = sphi 0, %s152
      %s153 = sphi 0, %s150
      %s154 = sphi 0, %s153
      %s170 = sphi 0, %s154
    $region4: #{tpu_custom_call.1} parent=1 // loop_header_branch
      %17 = sbr.rel (%p15) target = $region8
    $region5: #{tpu_custom_call.1} parent=1 // loop_body
      %s19 = ssub.s32 %s14, 1
      %s20 = ssub.s32 %s14, 2
      %s27 = sadd.s32 1, %s22
      %p28 = scmp.ge.s32.totalorder %s27, 1
      %s29 = scalar_select %p28, 0, %s27
      %s30 = sadd.s32 1, %s21
      %s31 = scalar_select %p28, %s30, %s21
      %p32 = scmp.ge.s32.totalorder %s31, 2
      %s33 = scalar_select %p32, 0, %s31
      %s34 = ssub.s32 %s21, %s33
      %s35 = ssub.s32 %s22, %s29
      %s36 = sor.u32 %s34, %s35
      %p37 = scmp.eq.s32.totalorder %s36, 0
      %s39 = sadd.s32 %s38, 1
      %s40 = scalar_select %p37, %s38, %s39
      %p43 = pneg %p37
      %p44 = scmp.eq.s32.totalorder %s14, 1
      %p45 = por %p43, %p44
      %p46 = scmp.ne.s32.totalorder %s38, %s41
      %p47 = scmp.eq.s32.totalorder %s14, 0
      %p48 = por %p46, %p47
      %p49 = scmp.ne.s32.totalorder %s38, %s41
      %p50 = scmp.eq.s32.totalorder %s19, 1
      %p51 = por %p49, %p50
      %p52 = scmp.ne.s32.totalorder %s41, %s42
      %p53 = scmp.eq.s32.totalorder %s19, 0
      %p54 = por %p52, %p53
      %p55 = scmp.ne.s32.totalorder %s41, %s42
      %p56 = scmp.eq.s32.totalorder %s20, 1
      %p57 = por %p55, %p56
      %p59 = scmp.ne.s32.totalorder %s42, %s58
      %p60 = scmp.eq.s32.totalorder %s20, 0
      %p61 = por %p59, %p60
      %s63 = sadd.s32 %s62, 1
      %p66 = scmp.eq.s32.totalorder %s14, 1
      %p67 = scmp.ne.s32.totalorder %s62, %s64
      %p68 = scmp.eq.s32.totalorder %s14, 0
      %p69 = por %p67, %p68
      %p70 = scmp.ne.s32.totalorder %s62, %s64
      %p71 = scmp.eq.s32.totalorder %s19, 1
      %p72 = por %p70, %p71
      %p73 = scmp.ne.s32.totalorder %s64, %s65
      %p74 = scmp.eq.s32.totalorder %s19, 0
      %p75 = por %p73, %p74
      %p76 = scmp.ne.s32.totalorder %s64, %s65
      %p77 = scmp.eq.s32.totalorder %s20, 1
      %p78 = por %p76, %p77
      %p80 = scmp.ne.s32.totalorder %s65, %s79
      %p81 = scmp.eq.s32.totalorder %s20, 0
      %p82 = por %p80, %p81
      %s84 = sadd.s32 %s83, 1
      %p87 = scmp.eq.s32.totalorder %s14, 1
      %p88 = scmp.ne.s32.totalorder %s83, %s85
      %p89 = scmp.eq.s32.totalorder %s14, 0
      %p90 = por %p88, %p89
      %p91 = scmp.ne.s32.totalorder %s83, %s85
      %p92 = scmp.eq.s32.totalorder %s19, 1
      %p93 = por %p91, %p92
      %p94 = scmp.ne.s32.totalorder %s85, %s86
      %p95 = scmp.eq.s32.totalorder %s19, 0
      %p96 = por %p94, %p95
      %p97 = scmp.ne.s32.totalorder %s85, %s86
      %p98 = scmp.eq.s32.totalorder %s20, 1
      %p99 = por %p97, %p98
      %p101 = scmp.ne.s32.totalorder %s86, %s100
      %p102 = scmp.eq.s32.totalorder %s20, 0
      %p103 = por %p101, %p102
      %s105 = sadd.s32 %s104, 1
      %p108 = scmp.eq.s32.totalorder %s14, 1
      %p109 = scmp.ne.s32.totalorder %s104, %s106
      %p110 = scmp.eq.s32.totalorder %s14, 0
      %p111 = por %p109, %p110
      %p112 = scmp.ne.s32.totalorder %s104, %s106
      %p113 = scmp.eq.s32.totalorder %s19, 1
      %p114 = por %p112, %p113
      %p115 = scmp.ne.s32.totalorder %s106, %s107
      %p116 = scmp.eq.s32.totalorder %s19, 0
      %p117 = por %p115, %p116
      %p118 = scmp.ne.s32.totalorder %s106, %s107
      %p119 = scmp.eq.s32.totalorder %s20, 1
      %p120 = por %p118, %p119
      %p122 = scmp.ne.s32.totalorder %s107, %s121
      %p123 = scmp.eq.s32.totalorder %s20, 0
      %p124 = por %p122, %p123
      %s126 = sadd.s32 %s125, 1
      %p129 = scmp.eq.s32.totalorder %s14, 1
      %p130 = scmp.ne.s32.totalorder %s125, %s127
      %p131 = scmp.eq.s32.totalorder %s14, 0
      %p132 = por %p130, %p131
      %p133 = scmp.ne.s32.totalorder %s125, %s127
      %p134 = scmp.eq.s32.totalorder %s19, 1
      %p135 = por %p133, %p134
      %p136 = scmp.ne.s32.totalorder %s127, %s128
      %p137 = scmp.eq.s32.totalorder %s19, 0
      %p138 = por %p136, %p137
      %p139 = scmp.ne.s32.totalorder %s127, %s128
      %p140 = scmp.eq.s32.totalorder %s20, 1
      %p141 = por %p139, %p140
      %p143 = scmp.ne.s32.totalorder %s128, %s142
      %p144 = scmp.eq.s32.totalorder %s20, 0
      %p145 = por %p143, %p144
      %s146 = ssub.s32 %s21, %s33
      %s147 = ssub.s32 %s22, %s29
      %s148 = sor.u32 %s146, %s147
      %p149 = scmp.eq.s32.totalorder %s148, 0
      %s151 = sadd.s32 %s150, 1
      %s152 = scalar_select %p149, %s150, %s151
      %p155 = pneg %p149
      %p156 = scmp.eq.s32.totalorder %s14, 1
      %p157 = por %p155, %p156
      %p158 = scmp.ne.s32.totalorder %s150, %s153
      %p159 = scmp.eq.s32.totalorder %s14, 0
      %p160 = por %p158, %p159
      %p161 = scmp.ne.s32.totalorder %s150, %s153
      %p162 = scmp.eq.s32.totalorder %s19, 1
      %p163 = por %p161, %p162
      %p164 = scmp.ne.s32.totalorder %s153, %s154
      %p165 = scmp.eq.s32.totalorder %s19, 0
      %p166 = por %p164, %p165
      %p167 = scmp.ne.s32.totalorder %s153, %s154
      %p168 = scmp.eq.s32.totalorder %s20, 1
      %p169 = por %p167, %p168
      %p171 = scmp.ne.s32.totalorder %s154, %s170
      %p172 = scmp.eq.s32.totalorder %s20, 0
      %p173 = por %p171, %p172
      %p174 = scmp.le.s32.totalorder 1, %s14
      %p175 = scmp.lt.s32.totalorder %s14, 3
      %p176 = pnand %p174, %p175
      %p177 = pneg %p176
      // Predicated region
      $region9: #{tpu_custom_call.1} parent=5 // pred_check
        _
      $region10: #{tpu_custom_call.1} parent=5 // pred_check_branch
        %179 = sbr.rel (%p176) target = $region12
      $region11: #{tpu_custom_call.1} parent=5 // pred_region
        %s180 = ssub.s32 %s14, 1
        // Predicated region
        $region13: #{tpu_custom_call.1} parent=11 // pred_check
          %p181 = pneg %p75
        $region14: #{tpu_custom_call.1} parent=11 // pred_check_branch
          %183 = sbr.rel (%p181) target = $region16
        $region15: #{tpu_custom_call.1} parent=11 // pred_region
          _
        $region16: #{tpu_custom_call.1} parent=11 // pred_fallthru
          _
        // Predicated region
        $region17: #{tpu_custom_call.1} parent=11 // pred_check
          %p184 = pneg %p96
        $region18: #{tpu_custom_call.1} parent=11 // pred_check_branch
          %186 = sbr.rel (%p184) target = $region20
        $region19: #{tpu_custom_call.1} parent=11 // pred_region
          _
        $region20: #{tpu_custom_call.1} parent=11 // pred_fallthru
          _
        // Predicated region
        $region21: #{tpu_custom_call.1} parent=11 // pred_check
          %p187 = pneg %p117
        $region22: #{tpu_custom_call.1} parent=11 // pred_check_branch
          %189 = sbr.rel (%p187) target = $region24
        $region23: #{tpu_custom_call.1} parent=11 // pred_region
          _
        $region24: #{tpu_custom_call.1} parent=11 // pred_fallthru
          _
        // Predicated region
        $region25: #{tpu_custom_call.1} parent=11 // pred_check
          %p190 = pneg %p138
        $region26: #{tpu_custom_call.1} parent=11 // pred_check_branch
          %192 = sbr.rel (%p190) target = $region28
        $region27: #{tpu_custom_call.1} parent=11 // pred_region
          _
        $region28: #{tpu_custom_call.1} parent=11 // pred_fallthru
          _
      $region12: #{tpu_custom_call.1} parent=5 // pred_fallthru
        _
      %p193 = scmp.lt.s32.totalorder %s14, 2
      // Predicated region
      $region29: #{tpu_custom_call.1} parent=5 // pred_check
        %p194 = pneg %p193
      $region30: #{tpu_custom_call.1} parent=5 // pred_check_branch
        %196 = sbr.rel (%p194) target = $region32
      $region31: #{tpu_custom_call.1} parent=5 // pred_region
        // Predicated region
        $region33: #{tpu_custom_call.1} parent=31 // pred_check
          %p197 = pneg %p48
        $region34: #{tpu_custom_call.1} parent=31 // pred_check_branch
          %199 = sbr.rel (%p197) target = $region36
        $region35: #{tpu_custom_call.1} parent=31 // pred_region
          %p200 = scmp.lt.s32.totalorder %s21, 1
          %s201 = scalar_select %p200, %s21, 1
          %p202 = scmp.lt.s32.totalorder %s22, 0
          %s203 = scalar_select %p202, %s22, 0
          %s204 = sadd.s32 %s203, %s201
          %s205 = smul.addr %s204, 8
          %s206 = scalar_lea.vmem %s0, %s205
        $region36: #{tpu_custom_call.1} parent=31 // pred_fallthru
          _
      $region32: #{tpu_custom_call.1} parent=5 // pred_fallthru
        _
      %p207 = scmp.le.s32.totalorder 1, %s14
      %p208 = scmp.lt.s32.totalorder %s14, 3
      %p209 = pnand %p207, %p208
      %p210 = pneg %p209
      // Predicated region
      $region37: #{tpu_custom_call.1} parent=5 // pred_check
        _
      $region38: #{tpu_custom_call.1} parent=5 // pred_check_branch
        %212 = sbr.rel (%p209) target = $region40
      $region39: #{tpu_custom_call.1} parent=5 // pred_region
        %s213 = ssub.s32 %s14, 1
        %p214 = scmp.lt.s32.totalorder %s23, 1
        %s215 = scalar_select %p214, %s23, 1
        %p216 = scmp.lt.s32.totalorder %s24, 0
        %s217 = scalar_select %p216, %s24, 0
        %s218 = sadd.s32 %s217, %s215
        %s219 = smul.addr %s218, 8
        %s220 = scalar_lea.vmem %s0, %s219
        %p221 = pneg %p54
        %p222 = pneg %p51
        %p223 = pneg %p75
        %p224 = pneg %p72
        %p225 = pneg %p96
        %p226 = pneg %p93
        %p227 = pneg %p117
        %p228 = pneg %p114
        %p229 = pneg %p138
        %p230 = pneg %p135
        %p231 = pneg %p166
        %p232 = pneg %p163
        %s233 = sand.u32 %s153, 1
        %s234 = scalar_lea.sflag [#allocation3], %s233
        %s235 = sand.u32 %s153, 1
        %s236 = smul.addr %s235, 8
        %s237 = scalar_lea.vmem [#allocation2], %s236
        %p238 = scmp.lt.s32.totalorder %s23, 1
        %s239 = scalar_select %p238, %s23, 1
        %p240 = scmp.lt.s32.totalorder %s24, 0
        %s241 = scalar_select %p240, %s24, 0
        %s242 = sadd.s32 %s241, %s239
        %s243 = smul.addr %s242, 8
        %s244 = scalar_lea.vmem %s0, %s243
        %v245 = vld [vmem:[%s244] sm:$0xff]
        %v246 = vld [vmem:[%s1] sm:$0xff]
        %v247 = vld [vmem:[%s1 + $0x8] sm:$0xff]
        %v248 = vld [vmem:[%s2] sm:$0xff]
        %v249 = vld [vmem:[%s2 + $0x8] sm:$0xff]
        %251 = vset.pattern.permute.xlu0 0
        %252 = vperm.xlu0 %251, %v248
        %v253 = vpop.permute.xlu0 %252
        %256 = vset.pattern.permute.xlu0 0
        %257 = vperm.xlu0 %256, %v249
        %v258 = vpop.permute.xlu0 %257
        %vm260 = vcmask 64512
        %v262 = vsel %vm260, %v246, 0
        %v265 = vsel %vm260, %v247, 0
        %267 = vmatpush.msra.mxu0 0.0
        %268 = vmatpush.msra.mxu0 0.0
        %269 = vmatpush.msra.mxu0 0.0
        %270 = vmatpush.msra.mxu0 0.0
        %271 = vmatpush.msra.mxu0 0.0
        %272 = vmatpush.msra.mxu0 0.0
        %273 = vmatpush.msra.mxu0 0.0
        %274 = vmatpush.msra.mxu0 0.0
        %275 = vmatpush.msra.mxu0 0.0
        %276 = vmatpush.msra.mxu0 0.0
        %277 = vmatpush.msra.mxu0 0.0
        %278 = vmatpush.msra.mxu0 0.0
        %279 = vmatpush.msra.mxu0 0.0
        %280 = vmatpush.msra.mxu0 0.0
        %281 = vmatpush.msra.mxu0 0.0
        %v282 = vand.u32 %v245, 4294901760
        %283 = vmatpush.msra.mxu0 %v282
        %v284 = vand.u32 %v262, 4294901760
        %v285 = vsub.f32 %v262, %v284
        %v286 = vand.u32 %v285, 4294901760
        %v287 = vsub.f32 %v285, %v286
        %v288 = vand.u32 %v287, 4294901760
        %289 = vmatmul.f32.gmra.mxu0 %v288
        %v290 = vpop.f32.mrf.mxu0
        %v291 = vadd.f32 %v253, %v290
        %v292 = vand.u32 %v265, 4294901760
        %v293 = vsub.f32 %v265, %v292
        %v294 = vand.u32 %v293, 4294901760
        %v295 = vsub.f32 %v293, %v294
        %v296 = vand.u32 %v295, 4294901760
        %297 = vmatmul.f32.gmra.mxu0 %v296
        %v298 = vpop.f32.mrf.mxu0
        %v299 = vadd.f32 %v258, %v298
        %300 = vdwg.mxu0
        %301 = vmatpush.msra.mxu0 0.0
        %302 = vmatpush.msra.mxu0 0.0
        %303 = vmatpush.msra.mxu0 0.0
        %304 = vmatpush.msra.mxu0 0.0
        %305 = vmatpush.msra.mxu0 0.0
        %306 = vmatpush.msra.mxu0 0.0
        %307 = vmatpush.msra.mxu0 0.0
        %308 = vmatpush.msra.mxu0 0.0
        %309 = vmatpush.msra.mxu0 0.0
        %310 = vmatpush.msra.mxu0 0.0
        %311 = vmatpush.msra.mxu0 0.0
        %312 = vmatpush.msra.mxu0 0.0
        %313 = vmatpush.msra.mxu0 0.0
        %314 = vmatpush.msra.mxu0 0.0
        %315 = vmatpush.msra.mxu0 0.0
        %v316 = vand.u32 %v245, 4294901760
        %v317 = vsub.f32 %v245, %v316
        %v318 = vand.u32 %v317, 4294901760
        %v319 = vsub.f32 %v317, %v318
        %v320 = vand.u32 %v319, 4294901760
        %321 = vmatpush.msra.mxu0 %v320
        %v322 = vand.u32 %v262, 4294901760
        %323 = vmatmul.f32.gmra.mxu0 %v322
        %v324 = vpop.f32.mrf.mxu0
        %v325 = vadd.f32 %v291, %v324
        %v326 = vand.u32 %v265, 4294901760
        %327 = vmatmul.f32.gmra.mxu0 %v326
        %v328 = vpop.f32.mrf.mxu0
        %v329 = vadd.f32 %v299, %v328
        %330 = vdwg.mxu0
        %331 = vmatpush.msra.mxu0 0.0
        %332 = vmatpush.msra.mxu0 0.0
        %333 = vmatpush.msra.mxu0 0.0
        %334 = vmatpush.msra.mxu0 0.0
        %335 = vmatpush.msra.mxu0 0.0
        %336 = vmatpush.msra.mxu0 0.0
        %337 = vmatpush.msra.mxu0 0.0
        %338 = vmatpush.msra.mxu0 0.0
        %339 = vmatpush.msra.mxu0 0.0
        %340 = vmatpush.msra.mxu0 0.0
        %341 = vmatpush.msra.mxu0 0.0
        %342 = vmatpush.msra.mxu0 0.0
        %343 = vmatpush.msra.mxu0 0.0
        %344 = vmatpush.msra.mxu0 0.0
        %345 = vmatpush.msra.mxu0 0.0
        %v346 = vand.u32 %v245, 4294901760
        %v347 = vsub.f32 %v245, %v346
        %348 = vmatpush.msra.mxu0 %v347
        %v349 = vand.u32 %v262, 4294901760
        %v350 = vsub.f32 %v262, %v349
        %351 = vmatmul.f32.gmra.mxu0 %v350
        %v352 = vpop.f32.mrf.mxu0
        %v353 = vadd.f32 %v325, %v352
        %v354 = vand.u32 %v265, 4294901760
        %v355 = vsub.f32 %v265, %v354
        %356 = vmatmul.f32.gmra.mxu0 %v355
        %v357 = vpop.f32.mrf.mxu0
        %v358 = vadd.f32 %v329, %v357
        %359 = vdwg.mxu0
        %360 = vmatpush.msra.mxu0 0.0
        %361 = vmatpush.msra.mxu0 0.0
        %362 = vmatpush.msra.mxu0 0.0
        %363 = vmatpush.msra.mxu0 0.0
        %364 = vmatpush.msra.mxu0 0.0
        %365 = vmatpush.msra.mxu0 0.0
        %366 = vmatpush.msra.mxu0 0.0
        %367 = vmatpush.msra.mxu0 0.0
        %368 = vmatpush.msra.mxu0 0.0
        %369 = vmatpush.msra.mxu0 0.0
        %370 = vmatpush.msra.mxu0 0.0
        %371 = vmatpush.msra.mxu0 0.0
        %372 = vmatpush.msra.mxu0 0.0
        %373 = vmatpush.msra.mxu0 0.0
        %374 = vmatpush.msra.mxu0 0.0
        %v375 = vand.u32 %v245, 4294901760
        %376 = vmatpush.msra.mxu0 %v375
        %v377 = vand.u32 %v262, 4294901760
        %v378 = vsub.f32 %v262, %v377
        %v379 = vand.u32 %v378, 4294901760
        %380 = vmatmul.f32.gmra.mxu0 %v379
        %v381 = vpop.f32.mrf.mxu0
        %v382 = vadd.f32 %v353, %v381
        %v383 = vand.u32 %v265, 4294901760
        %v384 = vsub.f32 %v265, %v383
        %v385 = vand.u32 %v384, 4294901760
        %386 = vmatmul.f32.gmra.mxu0 %v385
        %v387 = vpop.f32.mrf.mxu0
        %v388 = vadd.f32 %v358, %v387
        %389 = vdwg.mxu0
        %390 = vmatpush.msra.mxu0 0.0
        %391 = vmatpush.msra.mxu0 0.0
        %392 = vmatpush.msra.mxu0 0.0
        %393 = vmatpush.msra.mxu0 0.0
        %394 = vmatpush.msra.mxu0 0.0
        %395 = vmatpush.msra.mxu0 0.0
        %396 = vmatpush.msra.mxu0 0.0
        %397 = vmatpush.msra.mxu0 0.0
        %398 = vmatpush.msra.mxu0 0.0
        %399 = vmatpush.msra.mxu0 0.0
        %400 = vmatpush.msra.mxu0 0.0
        %401 = vmatpush.msra.mxu0 0.0
        %402 = vmatpush.msra.mxu0 0.0
        %403 = vmatpush.msra.mxu0 0.0
        %404 = vmatpush.msra.mxu0 0.0
        %v405 = vand.u32 %v245, 4294901760
        %v406 = vsub.f32 %v245, %v405
        %v407 = vand.u32 %v406, 4294901760
        %408 = vmatpush.msra.mxu0 %v407
        %v409 = vand.u32 %v262, 4294901760
        %410 = vmatmul.f32.gmra.mxu0 %v409
        %v411 = vpop.f32.mrf.mxu0
        %v412 = vadd.f32 %v382, %v411
        %v413 = vand.u32 %v265, 4294901760
        %414 = vmatmul.f32.gmra.mxu0 %v413
        %v415 = vpop.f32.mrf.mxu0
        %v416 = vadd.f32 %v388, %v415
        %417 = vdwg.mxu0
        %418 = vmatpush.msra.mxu0 0.0
        %419 = vmatpush.msra.mxu0 0.0
        %420 = vmatpush.msra.mxu0 0.0
        %421 = vmatpush.msra.mxu0 0.0
        %422 = vmatpush.msra.mxu0 0.0
        %423 = vmatpush.msra.mxu0 0.0
        %424 = vmatpush.msra.mxu0 0.0
        %425 = vmatpush.msra.mxu0 0.0
        %426 = vmatpush.msra.mxu0 0.0
        %427 = vmatpush.msra.mxu0 0.0
        %428 = vmatpush.msra.mxu0 0.0
        %429 = vmatpush.msra.mxu0 0.0
        %430 = vmatpush.msra.mxu0 0.0
        %431 = vmatpush.msra.mxu0 0.0
        %432 = vmatpush.msra.mxu0 0.0
        %v433 = vand.u32 %v245, 4294901760
        %434 = vmatpush.msra.mxu0 %v433
        %v435 = vand.u32 %v262, 4294901760
        %436 = vmatmul.f32.gmra.mxu0 %v435
        %v437 = vpop.f32.mrf.mxu0
        %v438 = vadd.f32 %v412, %v437
        %v439 = vand.u32 %v265, 4294901760
        %440 = vmatmul.f32.gmra.mxu0 %v439
        %v441 = vpop.f32.mrf.mxu0
        %v442 = vadd.f32 %v416, %v441
        %443 = vdwg.mxu0
        %v444 = vld [vmem:[%s3] sm:$0xff]
        %v445 = vld [vmem:[%s4] sm:$0xff]
        %447 = vset.pattern.permute.xlu0 0
        %448 = vperm.xlu0 %447, %v445
        %v449 = vpop.permute.xlu0 %448
        %vm451 = vcmask 130048
        %v453 = vsel %vm451, %v444, 0
        %455 = vmatpush.msra.mxu0 0.0
        %456 = vmatpush.msra.mxu0 0.0
        %457 = vmatpush.msra.mxu0 0.0
        %458 = vmatpush.msra.mxu0 0.0
        %459 = vmatpush.msra.mxu0 0.0
        %460 = vmatpush.msra.mxu0 0.0
        %461 = vmatpush.msra.mxu0 0.0
        %462 = vmatpush.msra.mxu0 0.0
        %463 = vmatpush.msra.mxu0 0.0
        %464 = vmatpush.msra.mxu0 0.0
        %465 = vmatpush.msra.mxu0 0.0
        %466 = vmatpush.msra.mxu0 0.0
        %467 = vmatpush.msra.mxu0 0.0
        %468 = vmatpush.msra.mxu0 0.0
        %v469 = vand.u32 %v442, 4294901760
        %470 = vmatpush.msra.mxu0 %v469
        %v471 = vand.u32 %v438, 4294901760
        %472 = vmatpush.msra.mxu0 %v471
        %v473 = vand.u32 %v453, 4294901760
        %v474 = vsub.f32 %v453, %v473
        %v475 = vand.u32 %v474, 4294901760
        %v476 = vsub.f32 %v474, %v475
        %v477 = vand.u32 %v476, 4294901760
        %478 = vmatmul.f32.gmra.mxu0 %v477
        %v479 = vpop.f32.mrf.mxu0
        %v480 = vadd.f32 %v449, %v479
        %481 = vdwg.mxu0
        %482 = vmatpush.msra.mxu0 0.0
        %483 = vmatpush.msra.mxu0 0.0
        %484 = vmatpush.msra.mxu0 0.0
        %485 = vmatpush.msra.mxu0 0.0
        %486 = vmatpush.msra.mxu0 0.0
        %487 = vmatpush.msra.mxu0 0.0
        %488 = vmatpush.msra.mxu0 0.0
        %489 = vmatpush.msra.mxu0 0.0
        %490 = vmatpush.msra.mxu0 0.0
        %491 = vmatpush.msra.mxu0 0.0
        %492 = vmatpush.msra.mxu0 0.0
        %493 = vmatpush.msra.mxu0 0.0
        %494 = vmatpush.msra.mxu0 0.0
        %495 = vmatpush.msra.mxu0 0.0
        %v496 = vand.u32 %v442, 4294901760
        %v497 = vsub.f32 %v442, %v496
        %v498 = vand.u32 %v497, 4294901760
        %v499 = vsub.f32 %v497, %v498
        %v500 = vand.u32 %v499, 4294901760
        %501 = vmatpush.msra.mxu0 %v500
        %v502 = vand.u32 %v438, 4294901760
        %v503 = vsub.f32 %v438, %v502
        %v504 = vand.u32 %v503, 4294901760
        %v505 = vsub.f32 %v503, %v504
        %v506 = vand.u32 %v505, 4294901760
        %507 = vmatpush.msra.mxu0 %v506
        %v508 = vand.u32 %v453, 4294901760
        %509 = vmatmul.f32.gmra.mxu0 %v508
        %v510 = vpop.f32.mrf.mxu0
        %v511 = vadd.f32 %v480, %v510
        %512 = vdwg.mxu0
        %513 = vmatpush.msra.mxu0 0.0
        %514 = vmatpush.msra.mxu0 0.0
        %515 = vmatpush.msra.mxu0 0.0
        %516 = vmatpush.msra.mxu0 0.0
        %517 = vmatpush.msra.mxu0 0.0
        %518 = vmatpush.msra.mxu0 0.0
        %519 = vmatpush.msra.mxu0 0.0
        %520 = vmatpush.msra.mxu0 0.0
        %521 = vmatpush.msra.mxu0 0.0
        %522 = vmatpush.msra.mxu0 0.0
        %523 = vmatpush.msra.mxu0 0.0
        %524 = vmatpush.msra.mxu0 0.0
        %525 = vmatpush.msra.mxu0 0.0
        %526 = vmatpush.msra.mxu0 0.0
        %v527 = vand.u32 %v442, 4294901760
        %v528 = vsub.f32 %v442, %v527
        %529 = vmatpush.msra.mxu0 %v528
        %v530 = vand.u32 %v438, 4294901760
        %v531 = vsub.f32 %v438, %v530
        %532 = vmatpush.msra.mxu0 %v531
        %v533 = vand.u32 %v453, 4294901760
        %v534 = vsub.f32 %v453, %v533
        %535 = vmatmul.f32.gmra.mxu0 %v534
        %v536 = vpop.f32.mrf.mxu0
        %v537 = vadd.f32 %v511, %v536
        %538 = vdwg.mxu0
        %539 = vmatpush.msra.mxu0 0.0
        %540 = vmatpush.msra.mxu0 0.0
        %541 = vmatpush.msra.mxu0 0.0
        %542 = vmatpush.msra.mxu0 0.0
        %543 = vmatpush.msra.mxu0 0.0
        %544 = vmatpush.msra.mxu0 0.0
        %545 = vmatpush.msra.mxu0 0.0
        %546 = vmatpush.msra.mxu0 0.0
        %547 = vmatpush.msra.mxu0 0.0
        %548 = vmatpush.msra.mxu0 0.0
        %549 = vmatpush.msra.mxu0 0.0
        %550 = vmatpush.msra.mxu0 0.0
        %551 = vmatpush.msra.mxu0 0.0
        %552 = vmatpush.msra.mxu0 0.0
        %v553 = vand.u32 %v442, 4294901760
        %554 = vmatpush.msra.mxu0 %v553
        %v555 = vand.u32 %v438, 4294901760
        %556 = vmatpush.msra.mxu0 %v555
        %v557 = vand.u32 %v453, 4294901760
        %v558 = vsub.f32 %v453, %v557
        %v559 = vand.u32 %v558, 4294901760
        %560 = vmatmul.f32.gmra.mxu0 %v559
        %v561 = vpop.f32.mrf.mxu0
        %v562 = vadd.f32 %v537, %v561
        %563 = vdwg.mxu0
        %564 = vmatpush.msra.mxu0 0.0
        %565 = vmatpush.msra.mxu0 0.0
        %566 = vmatpush.msra.mxu0 0.0
        %567 = vmatpush.msra.mxu0 0.0
        %568 = vmatpush.msra.mxu0 0.0
        %569 = vmatpush.msra.mxu0 0.0
        %570 = vmatpush.msra.mxu0 0.0
        %571 = vmatpush.msra.mxu0 0.0
        %572 = vmatpush.msra.mxu0 0.0
        %573 = vmatpush.msra.mxu0 0.0
        %574 = vmatpush.msra.mxu0 0.0
        %575 = vmatpush.msra.mxu0 0.0
        %576 = vmatpush.msra.mxu0 0.0
        %577 = vmatpush.msra.mxu0 0.0
        %v578 = vand.u32 %v442, 4294901760
        %v579 = vsub.f32 %v442, %v578
        %v580 = vand.u32 %v579, 4294901760
        %581 = vmatpush.msra.mxu0 %v580
        %v582 = vand.u32 %v438, 4294901760
        %v583 = vsub.f32 %v438, %v582
        %v584 = vand.u32 %v583, 4294901760
        %585 = vmatpush.msra.mxu0 %v584
        %v586 = vand.u32 %v453, 4294901760
        %587 = vmatmul.f32.gmra.mxu0 %v586
        %v588 = vpop.f32.mrf.mxu0
        %v589 = vadd.f32 %v562, %v588
        %590 = vdwg.mxu0
        %591 = vmatpush.msra.mxu0 0.0
        %592 = vmatpush.msra.mxu0 0.0
        %593 = vmatpush.msra.mxu0 0.0
        %594 = vmatpush.msra.mxu0 0.0
        %595 = vmatpush.msra.mxu0 0.0
        %596 = vmatpush.msra.mxu0 0.0
        %597 = vmatpush.msra.mxu0 0.0
        %598 = vmatpush.msra.mxu0 0.0
        %599 = vmatpush.msra.mxu0 0.0
        %600 = vmatpush.msra.mxu0 0.0
        %601 = vmatpush.msra.mxu0 0.0
        %602 = vmatpush.msra.mxu0 0.0
        %603 = vmatpush.msra.mxu0 0.0
        %604 = vmatpush.msra.mxu0 0.0
        %v605 = vand.u32 %v442, 4294901760
        %606 = vmatpush.msra.mxu0 %v605
        %v607 = vand.u32 %v438, 4294901760
        %608 = vmatpush.msra.mxu0 %v607
        %v609 = vand.u32 %v453, 4294901760
        %610 = vmatmul.f32.gmra.mxu0 %v609
        %v611 = vpop.f32.mrf.mxu0
        %v612 = vadd.f32 %v589, %v611
        %613 = vdwg.mxu0
        %614 = vst [vmem:[%s237] sm:$0xff] %v612
        %s615 = sand.u32 %s153, 1
        %s616 = scalar_lea.sflag [#allocation3], %s615
        %s617 = sand.u32 %s153, 1
        %s618 = smul.addr %s617, 8
        %s619 = scalar_lea.vmem [#allocation2], %s618
        // Predicated region
        $region41: #{tpu_custom_call.1} parent=39 // pred_check
          %p620 = pneg %p163
        $region42: #{tpu_custom_call.1} parent=39 // pred_check_branch
          %622 = sbr.rel (%p620) target = $region44
        $region43: #{tpu_custom_call.1} parent=39 // pred_region
          %624 = vsyncadd %s616, 0
          %s625 = sadd.s32 %s24, %s23
          %s626 = smul.addr %s625, 8
          %s627 = scalar_lea.hbm %s5, %s626
          %s629 = sshll.u32 %s619, 4
          %s630 = int_to_ptr.vmem [resolvable:$true] %s629
          %s631 = sshll.u32 %s627, 4
          %s632 = int_to_ptr.hbm [resolvable:$true] %s631
          %634 = dma.vmem_to_hbm [thread:$0]  %s630, 128, %s632, %s616
        $region44: #{tpu_custom_call.1} parent=39 // pred_fallthru
          _
      $region40: #{tpu_custom_call.1} parent=5 // pred_fallthru
        _
      %p635 = scmp.le.s32.totalorder 2, %s14
      // Predicated region
      $region45: #{tpu_custom_call.1} parent=5 // pred_check
        %p636 = pneg %p635
      $region46: #{tpu_custom_call.1} parent=5 // pred_check_branch
        %638 = sbr.rel (%p636) target = $region48
      $region47: #{tpu_custom_call.1} parent=5 // pred_region
        %s639 = ssub.s32 %s14, 2
        // Predicated region
        $region49: #{tpu_custom_call.1} parent=47 // pred_check
          %p640 = pneg %p169
        $region50: #{tpu_custom_call.1} parent=47 // pred_check_branch
          %642 = sbr.rel (%p640) target = $region52
        $region51: #{tpu_custom_call.1} parent=47 // pred_region
          %s643 = sand.u32 %s154, 1
          %s644 = scalar_lea.sflag [#allocation3], %s643
          %s645 = sand.u32 %s154, 1
          %s646 = smul.addr %s645, 8
          %s647 = scalar_lea.vmem [#allocation2], %s646
          %649 = dma.done %s644, 128
        $region52: #{tpu_custom_call.1} parent=47 // pred_fallthru
          _
      $region48: #{tpu_custom_call.1} parent=5 // pred_fallthru
        _
    $region6: #{tpu_custom_call.1} parent=1 // loop_footer
      %s18 = sadd.s32 1, %s14
    $region7: #{tpu_custom_call.1} parent=1 // loop_footer_branch
      %13 = sbr.rel target = $region3
    $region8: #{tpu_custom_call.1} parent=1 // loop_exit
      _
    %650 = vsyncpa [#allocation3], 1
    %s651 = scalar_lea.sflag [#allocation3], 1
    %652 = vsyncpa %s651, 1

</llo_original>
